<compile_context>
chip_gen: v7x
topology: tpu7x:2x2x1
jax: 0.10.0
libtpu: 0.0.40
codegen_flags: <defaults>
</compile_context>

<pallas_src>
import jax
import jax.numpy as jnp
from jax import lax
from jax.experimental import pallas as pl
from jax.experimental.pallas import tpu as pltpu


def _round_up(x: int, m: int) -> int:
    return ((x + m - 1) // m) * m


def _compgcn_scatter_kernel(comp_out_ref, comp_in_ref, ids_ref,
                            w_out_ref, w_in_ref, out_ref):
    """One edge tile: two message GEMMs + scatter-add into the resident output.

    comp_out_ref : [TE, Cin_pad]   bf16  comp(node[s], rel[r]) * edge_scale
    comp_in_ref  : [TE, Cin_pad]   bf16  comp(node[t], rel[r]) * edge_scale
    ids_ref      : [1, 2, TE]      int32 row0 = t ids (targets of msg_out)
                                         row1 = s ids (targets of msg_in)
    w_out/w_in   : [Cin_pad, Cout_pad] bf16
    out_ref      : [TN, Cout_pad]  f32   node rows owned by this shard
    """
    f32 = jnp.float32
    bf16 = jnp.bfloat16
    c = pl.program_id(0)          # node-row shard (parallel; megacore on v7x)
    e = pl.program_id(1)          # edge tile      (arbitrary / reduction)

    @pl.when(e == 0)
    def _init():
        out_ref[...] = jnp.zeros_like(out_ref)

    # Message GEMMs: bf16 x bf16 -> f32 on the MXU.
    msg_out = jnp.dot(comp_out_ref[...], w_out_ref[...], preferred_element_type=f32)
    msg_in = jnp.dot(comp_in_ref[...], w_in_ref[...], preferred_element_type=f32)

    # Scatter-add via exact 0/1 matrices built on the fly in VMEM (iota+compare
    # on the VPU).  The grid is a serial loop per TensorCore -> += is race free.
    tn = out_ref.shape[0]
    te = comp_out_ref.shape[0]
    row_ids = lax.broadcasted_iota(jnp.int32, (tn, te), 0) + c * tn
    ids = ids_ref[0]                                     # [2, TE]
    t_scatter = (row_ids == ids[0:1, :]).astype(bf16)    # [TN, TE]
    s_scatter = (row_ids == ids[1:2, :]).astype(bf16)    # [TN, TE]

    out_ref[...] += (
        jnp.dot(t_scatter, msg_out.astype(bf16), preferred_element_type=f32)
        + jnp.dot(s_scatter, msg_in.astype(bf16), preferred_element_type=f32))
    # TODO(synk): for very large graphs, bucket edges by destination-node tile
    # (scalar-prefetched bucket offsets) so the scatter matrix is [TN_tile, TE]
    # instead of all shard rows -> edge-proportional scatter FLOPs.


def compgcn_conv(node_emb, rel_emb, edge_index, params, comp_fn="mult",
                 edge_norm=True, edge_tile=256, num_node_shards=1):
    """CompGCNConv forward.  edge_index: [E, 3] int (src, rel_type, dst).

    edge_tile       : edges per grid step (multiple of 128).  ~512 on v6e,
                      128-256 on v5e; keep the working set under ~48 MiB on v7x.
    num_node_shards : leading "parallel" grid axis; set 2 on v7x (2 TCs/chip).
    """
    f32 = jnp.float32
    bf16 = jnp.bfloat16
    N, Cin = node_emb.shape
    Cout = params["w_out"].shape[1]
    E = edge_index.shape[0]

    if edge_tile % 128 != 0:
        raise ValueError("edge_tile must be a multiple of 128")
    TE = edge_tile
    E_pad = max(TE, _round_up(E, TE))
    n_tiles = E_pad // TE
    N_pad = _round_up(N, 128)
    Cin_pad = _round_up(Cin, 128)
    Cout_pad = _round_up(Cout, 128)
    S = num_node_shards
    if N_pad % S != 0 or (N_pad // S) % 8 != 0:
        raise ValueError("num_node_shards must split N_pad into multiples of 8 rows")
    TN = N_pad // S

    node_emb = node_emb.astype(f32)
    rel_emb = rel_emb.astype(f32)
    s = edge_index[:, 0].astype(jnp.int32)
    r = edge_index[:, 1].astype(jnp.int32)
    t = edge_index[:, 2].astype(jnp.int32)

    def comp(ent, rel):
        # The reference module implements 'corr' as elementwise mult; match it.
        if comp_fn in ("mult", "corr"):
            return ent * rel
        if comp_fn == "sub":
            return ent - rel
        raise ValueError(f"Unsupported composition: {comp_fn}")

    # ---- cheap edge-proportional glue in XLA: gathers, composition, norms ---
    comp_out = comp(node_emb[s], rel_emb[r])             # [E, Cin]
    comp_in = comp(node_emb[t], rel_emb[r])              # [E, Cin]
    if edge_norm:
        ones_e = jnp.ones((E,), f32)
        s_deg = jax.ops.segment_sum(ones_e, s, num_segments=N)
        t_deg = jax.ops.segment_sum(ones_e, t, num_segments=N)
        s_deg_inv = jnp.where(s_deg > 0, s_deg ** -0.5, 0.0)
        t_deg_inv = jnp.where(t_deg > 0, t_deg ** -0.5, 0.0)
        # msg_out: *s_deg_inv[s] (edge), agg_out: *t_deg_inv (node) -> per edge
        # both collapse to s_deg_inv[s]*t_deg_inv[t]; same for the 'in' path.
        # Row scaling commutes with the weight matmul, so fold it here.
        edge_scale = (s_deg_inv[s] * t_deg_inv[t])[:, None]
        comp_out = comp_out * edge_scale
        comp_in = comp_in * edge_scale

    # ---- pad to lane-dense, MXU-friendly shapes; bf16 GEMM operands ---------
    comp_out_p = jnp.zeros((E_pad, Cin_pad), bf16).at[:E, :Cin].set(comp_out.astype(bf16))
    comp_in_p = jnp.zeros((E_pad, Cin_pad), bf16).at[:E, :Cin].set(comp_in.astype(bf16))

    pad_e = E_pad - E
    pad_id = jnp.int32(N_pad)   # never matches any row id (padded msgs are 0 anyway)
    t_p = jnp.concatenate([t, jnp.full((pad_e,), pad_id, jnp.int32)])
    s_p = jnp.concatenate([s, jnp.full((pad_e,), pad_id, jnp.int32)])
    ids = jnp.stack([t_p.reshape(n_tiles, TE), s_p.reshape(n_tiles, TE)], axis=1)

    w_out_p = jnp.zeros((Cin_pad, Cout_pad), bf16).at[:Cin, :Cout].set(
        params["w_out"].astype(bf16))
    w_in_p = jnp.zeros((Cin_pad, Cout_pad), bf16).at[:Cin, :Cout].set(
        params["w_in"].astype(bf16))

    grid_spec = pltpu.PrefetchScalarGridSpec(
        num_scalar_prefetch=0,
        grid=(S, n_tiles),
        in_specs=[
            pl.BlockSpec((TE, Cin_pad), lambda c, e: (e, 0)),        # comp_out tile
            pl.BlockSpec((TE, Cin_pad), lambda c, e: (e, 0)),        # comp_in tile
            pl.BlockSpec((1, 2, TE), lambda c, e: (e, 0, 0)),        # packed (t, s) ids
            pl.BlockSpec((Cin_pad, Cout_pad), lambda c, e: (0, 0)),  # w_out
            pl.BlockSpec((Cin_pad, Cout_pad), lambda c, e: (0, 0)),  # w_in
        ],
        out_specs=pl.BlockSpec((TN, Cout_pad), lambda c, e: (c, 0)),
    )

    agg = pl.pallas_call(
        _compgcn_scatter_kernel,
        out_shape=jax.ShapeDtypeStruct((N_pad, Cout_pad), f32),
        grid_spec=grid_spec,
        compiler_params=pltpu.CompilerParams(
            # Node-row shards across TensorCores (v7x megacore); the edge axis
            # carries the VMEM-resident output accumulator.
            dimension_semantics=("parallel", "arbitrary"),
            vmem_limit_bytes=48 * 1024 * 1024,   # under v7x's 64 MiB physical VMEM
        ),
    )(comp_out_p, comp_in_p, ids, w_out_p, w_in_p)

    # ---- self-loop path + final combine in the wrapper (off the epilogue) ---
    msg_loop = jnp.dot(comp(node_emb, params["loop_rel"].astype(f32)),
                       params["w_loop"].astype(f32),
                       precision=lax.Precision.HIGHEST)
    out = (agg[:N, :Cout] + msg_loop) / 3.0
    if params.get("bias") is not None:
        out = out + params["bias"].astype(f32)[None, :]
    # TODO(synk): training-mode dropout (F.dropout) not applied; identity for eval / p=0.
    return out


def _xavier_uniform(key, shape, gain):
    # nn.Linear weight is [out, in]; fan_in + fan_out = sum(shape)
    fan_out, fan_in = shape
    bound = gain * jnp.sqrt(6.0 / (fan_in + fan_out))
    return jax.random.uniform(key, shape, jnp.float32, -bound, bound)


def _reference(node_emb, rel_emb, edge_index, params, comp_fn="mult",
               edge_norm=True):
    """Pure-JAX f32 reference matching the PyTorch forward semantics."""
    hp = lax.Precision.HIGHEST
    s, r, t = edge_index[:, 0], edge_index[:, 1], edge_index[:, 2]
    n = node_emb.shape[0]
    ones = jnp.ones(s.shape, jnp.float32)
    t_deg = jax.ops.segment_sum(ones, t, num_segments=n)
    s_deg = jax.ops.segment_sum(ones, s, num_segments=n)
    t_deg_inv = jnp.where(t_deg > 0, t_deg ** -0.5, 0.0)
    s_deg_inv = jnp.where(s_deg > 0, s_deg ** -0.5, 0.0)

    def comp(ent, rl):
        return ent - rl if comp_fn == "sub" else ent * rl

    msg_out = jnp.dot(comp(node_emb[s], rel_emb[r]), params["w_out"], precision=hp)
    if edge_norm:
        msg_out = msg_out * s_deg_inv[s][:, None]
    agg_out = jax.ops.segment_sum(msg_out, t, num_segments=n)
    if edge_norm:
        agg_out = agg_out * t_deg_inv[:, None]

    msg_in = jnp.dot(comp(node_emb[t], rel_emb[r]), params["w_in"], precision=hp)
    if edge_norm:
        msg_in = msg_in * t_deg_inv[t][:, None]
    agg_in = jax.ops.segment_sum(msg_in, s, num_segments=n)
    if edge_norm:
        agg_in = agg_in * s_deg_inv[:, None]

    msg_loop = jnp.dot(comp(node_emb, params["loop_rel"]), params["w_loop"], precision=hp)
    return (agg_out + agg_in + msg_loop) / 3.0 + params["bias"][None, :]


if __name__ == "__main__":
    # Small deterministic shapes (exercise padding, multi-tile edge axis, and
    # the node-row sharding path).
    num_nodes, in_channels, out_channels = 64, 48, 40
    num_relations, num_edges = 5, 500

    key = jax.random.PRNGKey(0)
    (k_node, k_rel, k_s, k_r, k_t, k_wl, k_wi, k_wo, k_wr, k_lr) = \
        jax.random.split(key, 10)

    node_emb = jax.random.normal(k_node, (num_nodes, in_channels), jnp.float32)
    rel_emb = jax.random.normal(k_rel, (num_relations, in_channels), jnp.float32)
    edge_index = jnp.stack([
        jax.random.randint(k_s, (num_edges,), 0, num_nodes),
        jax.random.randint(k_r, (num_edges,), 0, num_relations),
        jax.random.randint(k_t, (num_edges,), 0, num_nodes),
    ], axis=1).astype(jnp.int32)                     # [E, 3] (src, rel, dst)

    gain = jnp.sqrt(2.0)  # calculate_gain('relu')
    params = {
        # nn.Linear stores weight as [out, in]; kernel uses x @ W with W = weight.T
        "w_loop": _xavier_uniform(k_wl, (out_channels, in_channels), gain).T,
        "w_in":   _xavier_uniform(k_wi, (out_channels, in_channels), gain).T,
        "w_out":  _xavier_uniform(k_wo, (out_channels, in_channels), gain).T,
        # w_rel is a module parameter but unused in the node-update forward.
        "w_rel":  _xavier_uniform(k_wr, (out_channels, in_channels), gain).T,
        "loop_rel": _xavier_uniform(k_lr, (1, in_channels), gain),
        "bias": jnp.zeros((out_channels,), jnp.float32),
    }

    # Config 1: 'mult', edge_norm, multi-tile edge axis, 2-way node-row shards
    # (the v7x megacore path; runs as a serial loop on 1-TC chips).
    out = compgcn_conv(node_emb, rel_emb, edge_index, params,
                       comp_fn="mult", edge_norm=True,
                       edge_tile=128, num_node_shards=2)
    out = jax.block_until_ready(out)
    ref = _reference(node_emb, rel_emb, edge_index, params,
                     comp_fn="mult", edge_norm=True)
    assert out.shape == (num_nodes, out_channels)
    err = jnp.max(jnp.abs(out - ref))
    # bf16 MXU operands (vs f32 reference) -> looser tolerance than pure f32.
    assert jnp.allclose(out, ref, atol=3e-2, rtol=3e-2), f"mult: max abs err {err}"

    # Config 2: 'sub', no edge norm, single shard, larger edge tile.
    out2 = compgcn_conv(node_emb, rel_emb, edge_index, params,
                        comp_fn="sub", edge_norm=False,
                        edge_tile=256, num_node_shards=1)
    out2 = jax.block_until_ready(out2)
    ref2 = _reference(node_emb, rel_emb, edge_index, params,
                      comp_fn="sub", edge_norm=False)
    err2 = jnp.max(jnp.abs(out2 - ref2))
    assert jnp.allclose(out2, ref2, atol=3e-2, rtol=3e-2), f"sub: max abs err {err2}"

    print("KERNEL_OK")
</pallas_src>

<mosaic_0001>
module attributes {stable_mosaic.version = 11 : i64} {
  func.func @_compgcn_scatter_kernel(%arg0: i32, %arg1: i32, %arg2: memref<128x128xbf16, #tpu.memory_space<vmem>>, %arg3: memref<128x128xbf16, #tpu.memory_space<vmem>>, %arg4: memref<1x2x128xi32, #tpu.memory_space<vmem>>, %arg5: memref<128x128xbf16, #tpu.memory_space<vmem>>, %arg6: memref<128x128xbf16, #tpu.memory_space<vmem>>, %arg7: memref<64x128xf32, #tpu.memory_space<vmem>>) attributes {dimension_semantics = [#tpu.dimension_semantics<parallel>, #tpu.dimension_semantics<arbitrary>], iteration_bounds = array<i64: 2, 4>, scalar_prefetch = 0 : i64, scratch_operands = 0 : i64, tpu.core_type = #tpu.core_type<tc>, window_params = [{transform_indices = @transform_0, window_bounds = array<i64: 128, 128>}, {transform_indices = @transform_1, window_bounds = array<i64: 128, 128>}, {transform_indices = @transform_2, window_bounds = array<i64: 1, 2, 128>}, {pipeline_mode = #tpu.pipeline_mode<synchronous>, transform_indices = @transform_3, window_bounds = array<i64: 128, 128>}, {pipeline_mode = #tpu.pipeline_mode<synchronous>, transform_indices = @transform_4, window_bounds = array<i64: 128, 128>}, {transform_indices = @transform_5, window_bounds = array<i64: 64, 128>}]} {
    %c0_i32 = arith.constant 0 : i32
    %0 = arith.cmpi eq, %arg1, %c0_i32 : i32
    %1 = arith.extui %0 : i1 to i32
    %c0_i32_0 = arith.constant 0 : i32
    %2 = arith.cmpi ne, %1, %c0_i32_0 : i32
    scf.if %2 {
      %cst_18 = arith.constant 0.000000e+00 : f32
      %35 = vector.broadcast %cst_18 : f32 to vector<64x128xf32>
      %c0_19 = arith.constant 0 : index
      %c0_20 = arith.constant 0 : index
      %36 = vector.load %arg7[%c0_19, %c0_20] : memref<64x128xf32, #tpu.memory_space<vmem>>, vector<64x128xf32>
      tpu.vector_store %arg7[%c0_19, %c0_20], %35 {strides = array<i32>} : memref<64x128xf32, #tpu.memory_space<vmem>>, vector<64x128xf32>,
    } else {
    }
    %c0 = arith.constant 0 : index
    %c0_1 = arith.constant 0 : index
    %3 = vector.load %arg2[%c0, %c0_1] : memref<128x128xbf16, #tpu.memory_space<vmem>>, vector<128x128xbf16>
    %c0_2 = arith.constant 0 : index
    %c0_3 = arith.constant 0 : index
    %4 = vector.load %arg5[%c0_2, %c0_3] : memref<128x128xbf16, #tpu.memory_space<vmem>>, vector<128x128xbf16>
    %cst = arith.constant dense<0.000000e+00> : vector<128x128xf32>
    %5 = tpu.matmul %3, %4, %cst {dimension_numbers = #tpu.dot_dimension_numbers<[1], [0], [0], [1], [0, 0, 1, 1], [], []>} : vector<128x128xbf16>, vector<128x128xbf16>, vector<128x128xf32> -> vector<128x128xf32>
    %c0_4 = arith.constant 0 : index
    %c0_5 = arith.constant 0 : index
    %6 = vector.load %arg3[%c0_4, %c0_5] : memref<128x128xbf16, #tpu.memory_space<vmem>>, vector<128x128xbf16>
    %c0_6 = arith.constant 0 : index
    %c0_7 = arith.constant 0 : index
    %7 = vector.load %arg6[%c0_6, %c0_7] : memref<128x128xbf16, #tpu.memory_space<vmem>>, vector<128x128xbf16>
    %cst_8 = arith.constant dense<0.000000e+00> : vector<128x128xf32>
    %8 = tpu.matmul %6, %7, %cst_8 {dimension_numbers = #tpu.dot_dimension_numbers<[1], [0], [0], [1], [0, 0, 1, 1], [], []>} : vector<128x128xbf16>, vector<128x128xbf16>, vector<128x128xf32> -> vector<128x128xf32>
    %9 = tpu.iota {dimensions = array<i32: 0>} : vector<64x128xi32>
    %c64_i32 = arith.constant 64 : i32
    %10 = arith.muli %arg0, %c64_i32 : i32
    %11 = vector.broadcast %10 : i32 to vector<64x128xi32>
    %12 = arith.addi %9, %11 : vector<64x128xi32>
    %c0_9 = arith.constant 0 : index
    %c0_10 = arith.constant 0 : index
    %c0_11 = arith.constant 0 : index
    %13 = vector.load %arg4[%c0_9, %c0_10, %c0_11] : memref<1x2x128xi32, #tpu.memory_space<vmem>>, vector<1x2x128xi32>
    %14 = vector.shape_cast %13 : vector<1x2x128xi32> to vector<2x128xi32>
    %15 = vector.extract_strided_slice %14 {offsets = [0, 0], sizes = [1, 128], strides = [1, 1]} : vector<2x128xi32> to vector<1x128xi32>
    %16 = vector.broadcast %15 : vector<1x128xi32> to vector<64x128xi32>
    %17 = arith.cmpi eq, %12, %16 : vector<64x128xi32>
    %18 = arith.extui %17 : vector<64x128xi1> to vector<64x128xi32>
    %19 = arith.sitofp %18 : vector<64x128xi32> to vector<64x128xf32>
    %20 = arith.truncf %19 : vector<64x128xf32> to vector<64x128xbf16>
    %21 = vector.extract_strided_slice %14 {offsets = [1, 0], sizes = [1, 128], strides = [1, 1]} : vector<2x128xi32> to vector<1x128xi32>
    %22 = vector.broadcast %21 : vector<1x128xi32> to vector<64x128xi32>
    %23 = arith.cmpi eq, %12, %22 : vector<64x128xi32>
    %24 = arith.extui %23 : vector<64x128xi1> to vector<64x128xi32>
    %25 = arith.sitofp %24 : vector<64x128xi32> to vector<64x128xf32>
    %26 = arith.truncf %25 : vector<64x128xf32> to vector<64x128xbf16>
    %c0_12 = arith.constant 0 : index
    %c0_13 = arith.constant 0 : index
    %27 = vector.load %arg7[%c0_12, %c0_13] : memref<64x128xf32, #tpu.memory_space<vmem>>, vector<64x128xf32>
    %28 = arith.truncf %5 : vector<128x128xf32> to vector<128x128xbf16>
    %cst_14 = arith.constant dense<0.000000e+00> : vector<64x128xf32>
    %29 = tpu.matmul %20, %28, %cst_14 {dimension_numbers = #tpu.dot_dimension_numbers<[1], [0], [0], [1], [0, 0, 1, 1], [], []>} : vector<64x128xbf16>, vector<128x128xbf16>, vector<64x128xf32> -> vector<64x128xf32>
    %30 = arith.truncf %8 : vector<128x128xf32> to vector<128x128xbf16>
    %cst_15 = arith.constant dense<0.000000e+00> : vector<64x128xf32>
    %31 = tpu.matmul %26, %30, %cst_15 {dimension_numbers = #tpu.dot_dimension_numbers<[1], [0], [0], [1], [0, 0, 1, 1], [], []>} : vector<64x128xbf16>, vector<128x128xbf16>, vector<64x128xf32> -> vector<64x128xf32>
    %32 = arith.addf %29, %31 : vector<64x128xf32>
    %33 = arith.addf %27, %32 : vector<64x128xf32>
    %c0_16 = arith.constant 0 : index
    %c0_17 = arith.constant 0 : index
    %34 = vector.load %arg7[%c0_16, %c0_17] : memref<64x128xf32, #tpu.memory_space<vmem>>, vector<64x128xf32>
    tpu.vector_store %arg7[%c0_16, %c0_17], %33 {strides = array<i32>} : memref<64x128xf32, #tpu.memory_space<vmem>>, vector<64x128xf32>,
    return
  }
  func.func @transform_0(%arg0: i32, %arg1: i32) -> (i32, i32) {
    %c0_i32 = arith.constant 0 : i32
    %c0_i32_0 = arith.constant 0 : i32
    return %arg1, %c0_i32 : i32, i32
  }
  func.func @transform_1(%arg0: i32, %arg1: i32) -> (i32, i32) {
    %c0_i32 = arith.constant 0 : i32
    %c0_i32_0 = arith.constant 0 : i32
    return %arg1, %c0_i32 : i32, i32
  }
  func.func @transform_2(%arg0: i32, %arg1: i32) -> (i32, i32, i32) {
    %c0_i32 = arith.constant 0 : i32
    %c0_i32_0 = arith.constant 0 : i32
    %c0_i32_1 = arith.constant 0 : i32
    return %arg1, %c0_i32, %c0_i32_0 : i32, i32, i32
  }
  func.func @transform_3(%arg0: i32, %arg1: i32) -> (i32, i32) {
    %c0_i32 = arith.constant 0 : i32
    %c0_i32_0 = arith.constant 0 : i32
    %c0_i32_1 = arith.constant 0 : i32
    return %c0_i32, %c0_i32_0 : i32, i32
  }
  func.func @transform_4(%arg0: i32, %arg1: i32) -> (i32, i32) {
    %c0_i32 = arith.constant 0 : i32
    %c0_i32_0 = arith.constant 0 : i32
    %c0_i32_1 = arith.constant 0 : i32
    return %c0_i32, %c0_i32_0 : i32, i32
  }
  func.func @transform_5(%arg0: i32, %arg1: i32) -> (i32, i32) {
    %c0_i32 = arith.constant 0 : i32
    %c0_i32_0 = arith.constant 0 : i32
    return %arg0, %c0_i32 : i32, i32
  }
}

</mosaic_0001>

<llo_original>
// kernel: tpu_custom_call.1
$region0: #{tpu_custom_call.1}
  #allocation0 [shape = 'u32[]', space=smem, size = 0x4, offset = 0x4, fixed_abs, tag = 'smem constant byte address 0x4 - core index']
  #allocation1 [shape = 'u32[144,128]{1,0:T(1,128)}', space=vmem, size = 0x12000, scoped, tag = 'internal scratch']
  %s0 = inlined_call_operand.hbm [shape: bf16[512,128], index: 0, kind: input, shape index: {}]
  %s1 = inlined_call_operand.hbm [shape: bf16[512,128], index: 1, kind: input, shape index: {}]
  %s2 = inlined_call_operand.hbm [shape: s32[4,2,128], index: 2, kind: input, shape index: {}]
  %s3 = inlined_call_operand.hbm [shape: bf16[128,128], index: 3, kind: input, shape index: {}]
  %s4 = inlined_call_operand.hbm [shape: bf16[128,128], index: 4, kind: input, shape index: {}]
  %s5 = inlined_call_operand.hbm [shape: f32[128,128], index: 5, kind: output, shape index: {}]
  %s6 = sld [smem:[#allocation0]]
  $region77: #{tpu_custom_call.1} parent=0
    _
  %s8 = ssub.s32 1, %s6
  %s9 = scalar_select 0, %s8, %s6
  $region1: #{tpu_custom_call.1} parent=0
    #allocation2 [shape = 'u8[65536]{0}', space=vmem, size = 0x10000, scoped, tag = 'input window, operand 0']
    #allocation3 [shape = 's32[2]{0}', space=sflag, size = 0x8, scoped, tag = 'scoped memory for tpu_custom_call.1']
    #allocation4 [shape = 's32[2]{0}', space=sflag, size = 0x8, scoped, tag = 'scoped memory for tpu_custom_call.1']
    #allocation5 [shape = 'u8[65536]{0}', space=vmem, size = 0x10000, scoped, tag = 'input window, operand 1']
    #allocation6 [shape = 's32[2]{0}', space=sflag, size = 0x8, scoped, tag = 'scoped memory for tpu_custom_call.1']
    #allocation7 [shape = 'u8[2048]{0}', space=vmem, size = 0x800, scoped, tag = 'input window, operand 2']
    #allocation8 [shape = 'u8[32768]{0}', space=vmem, size = 0x8000, scoped, tag = 'input window, operand 3, single buffered']
    #allocation9 [shape = 's32[1]{0}', space=sflag, size = 0x4, scoped, tag = 'scoped memory for tpu_custom_call.1']
    #allocation10 [shape = 'u8[32768]{0}', space=vmem, size = 0x8000, scoped, tag = 'input window, operand 4, single buffered']
    #allocation11 [shape = 'u8[65536]{0}', space=vmem, size = 0x10000, scoped, tag = 'output window, operand 0']
    %10 = vsyncpa [#allocation3], 0
    %s11 = scalar_lea.sflag [#allocation3], 1
    %12 = vsyncpa %s11, 0
    %13 = vsyncpa [#allocation6], 0
    %s14 = scalar_lea.sflag [#allocation6], 1
    %15 = vsyncpa %s14, 0
    %16 = vsyncpa [#allocation9], 0
    %17 = vsyncpa [#allocation4], 0
    %s18 = scalar_lea.sflag [#allocation4], 1
    %19 = vsyncpa %s18, 0
    loop: start=0, step=1, limit=10
    $region2: #{tpu_custom_call.1} parent=1 // loop_pre_header
      _
    $region3: #{tpu_custom_call.1} parent=1 // loop_header
      %s21 = sphi 0, %s25
      %p22 = scmp.ge.s32.totalorder %s21, 10
      %s28 = sphi 0, %s40
      %s29 = sphi 0, %s36
      %s30 = sphi 0, %s28
      %s31 = sphi 0, %s29
      %s32 = sphi 0, %s30
      %s33 = sphi 0, %s31
      %s43 = sphi 0, %s45
      %s46 = sphi 0, %s43
      %s47 = sphi 0, %s46
      %s63 = sphi 0, %s47
      %s69 = sphi 0, %s71
      %s72 = sphi 0, %s69
      %s73 = sphi 0, %s72
      %s89 = sphi 0, %s73
      %s95 = sphi 0, %s97
      %s98 = sphi 0, %s95
      %s99 = sphi 0, %s98
      %s115 = sphi 0, %s99
      %s119 = sphi 0, %s119
      %s121 = sphi 0, %s119
      %s122 = sphi 0, %s121
      %s136 = sphi 0, %s122
      %s140 = sphi 0, %s140
      %s142 = sphi 0, %s140
      %s143 = sphi 0, %s142
      %s157 = sphi 0, %s143
      %s163 = sphi 0, %s165
      %s166 = sphi 0, %s163
      %s167 = sphi 0, %s166
      %s183 = sphi 0, %s167
    $region4: #{tpu_custom_call.1} parent=1 // loop_header_branch
      %24 = sbr.rel (%p22) target = $region8
    $region5: #{tpu_custom_call.1} parent=1 // loop_body
      %s26 = ssub.s32 %s21, 1
      %s27 = ssub.s32 %s21, 2
      %s34 = sadd.s32 1, %s29
      %p35 = scmp.ge.s32.totalorder %s34, 4
      %s36 = scalar_select %p35, 0, %s34
      %s37 = sadd.s32 1, %s28
      %s38 = scalar_select %p35, %s37, %s28
      %p39 = scmp.ge.s32.totalorder %s38, 2
      %s40 = scalar_select %p39, 0, %s38
      %s41 = ssub.s32 %s29, %s36
      %p42 = scmp.eq.s32.totalorder %s41, 0
      %s44 = sadd.s32 %s43, 1
      %s45 = scalar_select %p42, %s43, %s44
      %p48 = pneg %p42
      %p49 = scmp.eq.s32.totalorder %s21, 7
      %p50 = por %p48, %p49
      %p51 = scmp.ne.s32.totalorder %s43, %s46
      %p52 = scmp.eq.s32.totalorder %s21, 0
      %p53 = por %p51, %p52
      %p54 = scmp.ne.s32.totalorder %s43, %s46
      %p55 = scmp.eq.s32.totalorder %s26, 7
      %p56 = por %p54, %p55
      %p57 = scmp.ne.s32.totalorder %s46, %s47
      %p58 = scmp.eq.s32.totalorder %s26, 0
      %p59 = por %p57, %p58
      %p60 = scmp.ne.s32.totalorder %s46, %s47
      %p61 = scmp.eq.s32.totalorder %s27, 7
      %p62 = por %p60, %p61
      %p64 = scmp.ne.s32.totalorder %s47, %s63
      %p65 = scmp.eq.s32.totalorder %s27, 0
      %p66 = por %p64, %p65
      %s67 = ssub.s32 %s29, %s36
      %p68 = scmp.eq.s32.totalorder %s67, 0
      %s70 = sadd.s32 %s69, 1
      %s71 = scalar_select %p68, %s69, %s70
      %p74 = pneg %p68
      %p75 = scmp.eq.s32.totalorder %s21, 7
      %p76 = por %p74, %p75
      %p77 = scmp.ne.s32.totalorder %s69, %s72
      %p78 = scmp.eq.s32.totalorder %s21, 0
      %p79 = por %p77, %p78
      %p80 = scmp.ne.s32.totalorder %s69, %s72
      %p81 = scmp.eq.s32.totalorder %s26, 7
      %p82 = por %p80, %p81
      %p83 = scmp.ne.s32.totalorder %s72, %s73
      %p84 = scmp.eq.s32.totalorder %s26, 0
      %p85 = por %p83, %p84
      %p86 = scmp.ne.s32.totalorder %s72, %s73
      %p87 = scmp.eq.s32.totalorder %s27, 7
      %p88 = por %p86, %p87
      %p90 = scmp.ne.s32.totalorder %s73, %s89
      %p91 = scmp.eq.s32.totalorder %s27, 0
      %p92 = por %p90, %p91
      %s93 = ssub.s32 %s29, %s36
      %p94 = scmp.eq.s32.totalorder %s93, 0
      %s96 = sadd.s32 %s95, 1
      %s97 = scalar_select %p94, %s95, %s96
      %p100 = pneg %p94
      %p101 = scmp.eq.s32.totalorder %s21, 7
      %p102 = por %p100, %p101
      %p103 = scmp.ne.s32.totalorder %s95, %s98
      %p104 = scmp.eq.s32.totalorder %s21, 0
      %p105 = por %p103, %p104
      %p106 = scmp.ne.s32.totalorder %s95, %s98
      %p107 = scmp.eq.s32.totalorder %s26, 7
      %p108 = por %p106, %p107
      %p109 = scmp.ne.s32.totalorder %s98, %s99
      %p110 = scmp.eq.s32.totalorder %s26, 0
      %p111 = por %p109, %p110
      %p112 = scmp.ne.s32.totalorder %s98, %s99
      %p113 = scmp.eq.s32.totalorder %s27, 7
      %p114 = por %p112, %p113
      %p116 = scmp.ne.s32.totalorder %s99, %s115
      %p117 = scmp.eq.s32.totalorder %s27, 0
      %p118 = por %p116, %p117
      %s120 = sadd.s32 %s119, 1
      %p123 = scmp.eq.s32.totalorder %s21, 7
      %p124 = scmp.ne.s32.totalorder %s119, %s121
      %p125 = scmp.eq.s32.totalorder %s21, 0
      %p126 = por %p124, %p125
      %p127 = scmp.ne.s32.totalorder %s119, %s121
      %p128 = scmp.eq.s32.totalorder %s26, 7
      %p129 = por %p127, %p128
      %p130 = scmp.ne.s32.totalorder %s121, %s122
      %p131 = scmp.eq.s32.totalorder %s26, 0
      %p132 = por %p130, %p131
      %p133 = scmp.ne.s32.totalorder %s121, %s122
      %p134 = scmp.eq.s32.totalorder %s27, 7
      %p135 = por %p133, %p134
      %p137 = scmp.ne.s32.totalorder %s122, %s136
      %p138 = scmp.eq.s32.totalorder %s27, 0
      %p139 = por %p137, %p138
      %s141 = sadd.s32 %s140, 1
      %p144 = scmp.eq.s32.totalorder %s21, 7
      %p145 = scmp.ne.s32.totalorder %s140, %s142
      %p146 = scmp.eq.s32.totalorder %s21, 0
      %p147 = por %p145, %p146
      %p148 = scmp.ne.s32.totalorder %s140, %s142
      %p149 = scmp.eq.s32.totalorder %s26, 7
      %p150 = por %p148, %p149
      %p151 = scmp.ne.s32.totalorder %s142, %s143
      %p152 = scmp.eq.s32.totalorder %s26, 0
      %p153 = por %p151, %p152
      %p154 = scmp.ne.s32.totalorder %s142, %s143
      %p155 = scmp.eq.s32.totalorder %s27, 7
      %p156 = por %p154, %p155
      %p158 = scmp.ne.s32.totalorder %s143, %s157
      %p159 = scmp.eq.s32.totalorder %s27, 0
      %p160 = por %p158, %p159
      %s161 = ssub.s32 %s28, %s40
      %p162 = scmp.eq.s32.totalorder %s161, 0
      %s164 = sadd.s32 %s163, 1
      %s165 = scalar_select %p162, %s163, %s164
      %p168 = pneg %p162
      %p169 = scmp.eq.s32.totalorder %s21, 7
      %p170 = por %p168, %p169
      %p171 = scmp.ne.s32.totalorder %s163, %s166
      %p172 = scmp.eq.s32.totalorder %s21, 0
      %p173 = por %p171, %p172
      %p174 = scmp.ne.s32.totalorder %s163, %s166
      %p175 = scmp.eq.s32.totalorder %s26, 7
      %p176 = por %p174, %p175
      %p177 = scmp.ne.s32.totalorder %s166, %s167
      %p178 = scmp.eq.s32.totalorder %s26, 0
      %p179 = por %p177, %p178
      %p180 = scmp.ne.s32.totalorder %s166, %s167
      %p181 = scmp.eq.s32.totalorder %s27, 7
      %p182 = por %p180, %p181
      %p184 = scmp.ne.s32.totalorder %s167, %s183
      %p185 = scmp.eq.s32.totalorder %s27, 0
      %p186 = por %p184, %p185
      %p187 = scmp.le.s32.totalorder 1, %s21
      %p188 = scmp.lt.s32.totalorder %s21, 9
      %p189 = pnand %p187, %p188
      %p190 = pneg %p189
      // Predicated region
      $region9: #{tpu_custom_call.1} parent=5 // pred_check
        _
      $region10: #{tpu_custom_call.1} parent=5 // pred_check_branch
        %192 = sbr.rel (%p189) target = $region12
      $region11: #{tpu_custom_call.1} parent=5 // pred_region
        %s193 = ssub.s32 %s21, 1
        // Predicated region
        $region13: #{tpu_custom_call.1} parent=11 // pred_check
          %p194 = pneg %p132
        $region14: #{tpu_custom_call.1} parent=11 // pred_check_branch
          %196 = sbr.rel (%p194) target = $region16
        $region15: #{tpu_custom_call.1} parent=11 // pred_region
          %s198 = ssub.s32 1024, 1024
          %199 = vsyncadd [#allocation9], %s198
          %s200 = sshll.u32 [#allocation8], 4
          %s201 = int_to_ptr.vmem [resolvable:$true] %s200
          %206 = dma.hbm_to_vmem [thread:$0]  %s3, 1024, %s201, [#allocation9], 64, 64, 4
        $region16: #{tpu_custom_call.1} parent=11 // pred_fallthru
          _
        // Predicated region
        $region17: #{tpu_custom_call.1} parent=11 // pred_check
          %p207 = pneg %p153
        $region18: #{tpu_custom_call.1} parent=11 // pred_check_branch
          %209 = sbr.rel (%p207) target = $region20
        $region19: #{tpu_custom_call.1} parent=11 // pred_region
          %s211 = ssub.s32 1024, 1024
          %212 = vsyncadd [#allocation9], %s211
          %s213 = sshll.u32 [#allocation10], 4
          %s214 = int_to_ptr.vmem [resolvable:$true] %s213
          %219 = dma.hbm_to_vmem [thread:$0]  %s4, 1024, %s214, [#allocation9], 64, 64, 4
        $region20: #{tpu_custom_call.1} parent=11 // pred_fallthru
          _
      $region12: #{tpu_custom_call.1} parent=5 // pred_fallthru
        _
      %p220 = scmp.lt.s32.totalorder %s21, 8
      // Predicated region
      $region21: #{tpu_custom_call.1} parent=5 // pred_check
        %p221 = pneg %p220
      $region22: #{tpu_custom_call.1} parent=5 // pred_check_branch
        %223 = sbr.rel (%p221) target = $region24
      $region23: #{tpu_custom_call.1} parent=5 // pred_region
        // Predicated region
        $region25: #{tpu_custom_call.1} parent=23 // pred_check
          %p224 = pneg %p53
        $region26: #{tpu_custom_call.1} parent=23 // pred_check_branch
          %226 = sbr.rel (%p224) target = $region28
        $region27: #{tpu_custom_call.1} parent=23 // pred_region
          %s227 = sand.u32 %s43, 1
          %s228 = scalar_lea.sflag [#allocation3], %s227
          %s229 = sand.u32 %s43, 1
          %s230 = smul.addr %s229, 64
          %s231 = scalar_lea.vmem [#allocation2], %s230
          %s232 = smul.u32 16, %s29
          %s234 = ssub.s32 1024, 1024
          %235 = vsyncadd %s228, %s234
          %s236 = smul.addr %s232, 64
          %s237 = scalar_lea.hbm %s0, %s236
          %s238 = sshll.u32 %s231, 4
          %s239 = int_to_ptr.vmem [resolvable:$true] %s238
          %244 = dma.hbm_to_vmem [thread:$0]  %s237, 1024, %s239, %s228, 64, 64, 4
        $region28: #{tpu_custom_call.1} parent=23 // pred_fallthru
          _
        // Predicated region
        $region29: #{tpu_custom_call.1} parent=23 // pred_check
          %p245 = pneg %p79
        $region30: #{tpu_custom_call.1} parent=23 // pred_check_branch
          %247 = sbr.rel (%p245) target = $region32
        $region31: #{tpu_custom_call.1} parent=23 // pred_region
          %s248 = sand.u32 %s21, 1
          %s249 = scalar_lea.sflag [#allocation6], %s248
          %s250 = sand.u32 %s69, 1
          %s251 = smul.addr %s250, 64
          %s252 = scalar_lea.vmem [#allocation5], %s251
          %s253 = smul.u32 16, %s29
          %s255 = ssub.s32 1024, 1024
          %256 = vsyncadd %s249, %s255
          %s257 = smul.addr %s253, 64
          %s258 = scalar_lea.hbm %s1, %s257
          %s259 = sshll.u32 %s252, 4
          %s260 = int_to_ptr.vmem [resolvable:$true] %s259
          %265 = dma.hbm_to_vmem [thread:$0]  %s258, 1024, %s260, %s249, 64, 64, 4
        $region32: #{tpu_custom_call.1} parent=23 // pred_fallthru
          _
        // Predicated region
        $region33: #{tpu_custom_call.1} parent=23 // pred_check
          %p266 = pneg %p105
        $region34: #{tpu_custom_call.1} parent=23 // pred_check_branch
          %268 = sbr.rel (%p266) target = $region36
        $region35: #{tpu_custom_call.1} parent=23 // pred_region
          %s269 = sand.u32 %s21, 1
          %s270 = scalar_lea.sflag [#allocation6], %s269
          %s271 = sand.u32 %s95, 1
          %s272 = smul.addr %s271, 2
          %s273 = scalar_lea.vmem [#allocation7], %s272
          %s275 = ssub.s32 32, 32
          %276 = vsyncadd %s270, %s275
          %s277 = smul.addr %s29, 32
          %s278 = scalar_lea.hbm %s2, %s277
          %s280 = sshll.u32 %s273, 4
          %s281 = int_to_ptr.vmem [resolvable:$true] %s280
          %283 = dma.hbm_to_vmem [thread:$0]  %s278, 32, %s281, %s270
        $region36: #{tpu_custom_call.1} parent=23 // pred_fallthru
          _
      $region24: #{tpu_custom_call.1} parent=5 // pred_fallthru
        _
      %p284 = scmp.le.s32.totalorder 1, %s21
      %p285 = scmp.lt.s32.totalorder %s21, 9
      %p286 = pnand %p284, %p285
      %p287 = pneg %p286
      // Predicated region
      $region37: #{tpu_custom_call.1} parent=5 // pred_check
        _
      $region38: #{tpu_custom_call.1} parent=5 // pred_check_branch
        %289 = sbr.rel (%p286) target = $region40
      $region39: #{tpu_custom_call.1} parent=5 // pred_region
        %s290 = ssub.s32 %s21, 1
        %s291 = sand.u32 %s46, 1
        %s292 = scalar_lea.sflag [#allocation3], %s291
        %s293 = sand.u32 %s46, 1
        %s294 = smul.addr %s293, 64
        %s295 = scalar_lea.vmem [#allocation2], %s294
        // Predicated region
        $region41: #{tpu_custom_call.1} parent=39 // pred_check
          %p296 = pneg %p59
        $region42: #{tpu_custom_call.1} parent=39 // pred_check_branch
          %298 = sbr.rel (%p296) target = $region44
        $region43: #{tpu_custom_call.1} parent=39 // pred_region
          %299 = dma.done %s292, 1024
        $region44: #{tpu_custom_call.1} parent=39 // pred_fallthru
          _
        %s300 = sand.u32 %s26, 1
        %s301 = scalar_lea.sflag [#allocation6], %s300
        %s302 = sand.u32 %s72, 1
        %s303 = smul.addr %s302, 64
        %s304 = scalar_lea.vmem [#allocation5], %s303
        // Predicated region
        $region45: #{tpu_custom_call.1} parent=39 // pred_check
          %p305 = pneg %p85
        $region46: #{tpu_custom_call.1} parent=39 // pred_check_branch
          %307 = sbr.rel (%p305) target = $region48
        $region47: #{tpu_custom_call.1} parent=39 // pred_region
          %308 = dma.done %s301, 1024
        $region48: #{tpu_custom_call.1} parent=39 // pred_fallthru
          _
        %s309 = sand.u32 %s26, 1
        %s310 = scalar_lea.sflag [#allocation6], %s309
        %s311 = sand.u32 %s98, 1
        %s312 = smul.addr %s311, 2
        %s313 = scalar_lea.vmem [#allocation7], %s312
        // Predicated region
        $region49: #{tpu_custom_call.1} parent=39 // pred_check
          %p314 = pneg %p111
        $region50: #{tpu_custom_call.1} parent=39 // pred_check_branch
          %316 = sbr.rel (%p314) target = $region52
        $region51: #{tpu_custom_call.1} parent=39 // pred_region
          %317 = dma.done %s310, 32
        $region52: #{tpu_custom_call.1} parent=39 // pred_fallthru
          _
        // Predicated region
        $region53: #{tpu_custom_call.1} parent=39 // pred_check
          %p318 = pneg %p132
        $region54: #{tpu_custom_call.1} parent=39 // pred_check_branch
          %320 = sbr.rel (%p318) target = $region56
        $region55: #{tpu_custom_call.1} parent=39 // pred_region
          %321 = dma.done [#allocation9], 1024
        $region56: #{tpu_custom_call.1} parent=39 // pred_fallthru
          _
        // Predicated region
        $region57: #{tpu_custom_call.1} parent=39 // pred_check
          %p322 = pneg %p153
        $region58: #{tpu_custom_call.1} parent=39 // pred_check_branch
          %324 = sbr.rel (%p322) target = $region60
        $region59: #{tpu_custom_call.1} parent=39 // pred_region
          %325 = dma.done [#allocation9], 1024
        $region60: #{tpu_custom_call.1} parent=39 // pred_fallthru
          _
        %s326 = sand.u32 %s46, 1
        %s327 = scalar_lea.sflag [#allocation3], %s326
        %s328 = sand.u32 %s46, 1
        %s329 = smul.addr %s328, 64
        %s330 = scalar_lea.vmem [#allocation2], %s329
        %p331 = pneg %p59
        %p332 = pneg %p56
        %s333 = sand.u32 %s26, 1
        %s334 = scalar_lea.sflag [#allocation6], %s333
        %s335 = sand.u32 %s72, 1
        %s336 = smul.addr %s335, 64
        %s337 = scalar_lea.vmem [#allocation5], %s336
        %p338 = pneg %p85
        %p339 = pneg %p82
        %s340 = sand.u32 %s26, 1
        %s341 = scalar_lea.sflag [#allocation6], %s340
        %s342 = sand.u32 %s98, 1
        %s343 = smul.addr %s342, 2
        %s344 = scalar_lea.vmem [#allocation7], %s343
        %p345 = pneg %p111
        %p346 = pneg %p108
        %p347 = pneg %p132
        %p348 = pneg %p129
        %p349 = pneg %p153
        %p350 = pneg %p150
        %p351 = pneg %p179
        %p352 = pneg %p176
        %s353 = sand.u32 %s166, 1
        %s354 = scalar_lea.sflag [#allocation4], %s353
        %s355 = sand.u32 %s166, 1
        %s356 = smul.addr %s355, 64
        %s357 = scalar_lea.vmem [#allocation11], %s356
        %s358 = smul.u32 16, %s31
        %s359 = smul.u32 16, %s31
        %s360 = smul.u32 8, %s30
        %p362 = scmp.eq.s32.totalorder %s31, 0
        // Predicated region
        $region61: #{tpu_custom_call.1} parent=39 // pred_check
          %p363 = pneg %p362
        $region62: #{tpu_custom_call.1} parent=39 // pred_check_branch
          %365 = sbr.rel (%p363) target = $region64
        $region63: #{tpu_custom_call.1} parent=39 // pred_region
          %366 = vst [vmem:[%s357] sm:$0xff] 0.0
          %367 = vst [vmem:[%s357 + $0x8] sm:$0xff] 0.0
          %368 = vst [vmem:[%s357 + $0x10] sm:$0xff] 0.0
          %369 = vst [vmem:[%s357 + $0x18] sm:$0xff] 0.0
          %370 = vst [vmem:[%s357 + $0x20] sm:$0xff] 0.0
          %371 = vst [vmem:[%s357 + $0x28] sm:$0xff] 0.0
          %372 = vst [vmem:[%s357 + $0x30] sm:$0xff] 0.0
          %373 = vst [vmem:[%s357 + $0x38] sm:$0xff] 0.0
        $region64: #{tpu_custom_call.1} parent=39 // pred_fallthru
          _
        %v374 = vld [vmem:[%s295] sm:$0xf]
        %v375 = vld [vmem:[%s295 + $0x4] sm:$0xf]
        %v376 = vld [vmem:[%s295 + $0x8] sm:$0xf]
        %v377 = vld [vmem:[%s295 + $0xc] sm:$0xf]
        %v378 = vld [vmem:[%s295 + $0x10] sm:$0xf]
        %v379 = vld [vmem:[%s295 + $0x14] sm:$0xf]
        %v380 = vld [vmem:[%s295 + $0x18] sm:$0xf]
        %v381 = vld [vmem:[%s295 + $0x1c] sm:$0xf]
        %v382 = vld [vmem:[%s295 + $0x20] sm:$0xf]
        %v383 = vld [vmem:[%s295 + $0x24] sm:$0xf]
        %v384 = vld [vmem:[%s295 + $0x28] sm:$0xf]
        %v385 = vld [vmem:[%s295 + $0x2c] sm:$0xf]
        %v386 = vld [vmem:[%s295 + $0x30] sm:$0xf]
        %v387 = vld [vmem:[%s295 + $0x34] sm:$0xf]
        %v388 = vld [vmem:[%s295 + $0x38] sm:$0xf]
        %v389 = vld [vmem:[%s295 + $0x3c] sm:$0xf]
        %v390 = vld [vmem:[#allocation8] sm:$0xf]
        %v391 = vld [vmem:[#allocation8 + $0x4] sm:$0xf]
        %v392 = vld [vmem:[#allocation8 + $0x8] sm:$0xf]
        %v393 = vld [vmem:[#allocation8 + $0xc] sm:$0xf]
        %v394 = vld [vmem:[#allocation8 + $0x10] sm:$0xf]
        %v395 = vld [vmem:[#allocation8 + $0x14] sm:$0xf]
        %v396 = vld [vmem:[#allocation8 + $0x18] sm:$0xf]
        %v397 = vld [vmem:[#allocation8 + $0x1c] sm:$0xf]
        %v398 = vld [vmem:[#allocation8 + $0x20] sm:$0xf]
        %v399 = vld [vmem:[#allocation8 + $0x24] sm:$0xf]
        %v400 = vld [vmem:[#allocation8 + $0x28] sm:$0xf]
        %v401 = vld [vmem:[#allocation8 + $0x2c] sm:$0xf]
        %v402 = vld [vmem:[#allocation8 + $0x30] sm:$0xf]
        %v403 = vld [vmem:[#allocation8 + $0x34] sm:$0xf]
        %v404 = vld [vmem:[#allocation8 + $0x38] sm:$0xf]
        %v405 = vld [vmem:[#allocation8 + $0x3c] sm:$0xf]
        %v422 = vunpack.c.l.b16 %v374
        %v423 = vunpack.c.l.b16 %v375
        %v424 = vunpack.c.l.b16 %v376
        %v425 = vunpack.c.l.b16 %v377
        %v426 = vunpack.c.l.b16 %v378
        %v427 = vunpack.c.l.b16 %v379
        %v428 = vunpack.c.l.b16 %v380
        %v429 = vunpack.c.l.b16 %v381
        %v430 = vunpack.c.l.b16 %v382
        %v431 = vunpack.c.l.b16 %v383
        %v432 = vunpack.c.l.b16 %v384
        %v433 = vunpack.c.l.b16 %v385
        %v434 = vunpack.c.l.b16 %v386
        %v435 = vunpack.c.l.b16 %v387
        %v436 = vunpack.c.l.b16 %v388
        %v437 = vunpack.c.l.b16 %v389
        %v438 = vpack.c.b16 %v423, %v422
        %v439 = vpack.c.b16 %v425, %v424
        %v440 = vpack.c.b16 %v427, %v426
        %v441 = vpack.c.b16 %v429, %v428
        %v442 = vpack.c.b16 %v431, %v430
        %v443 = vpack.c.b16 %v433, %v432
        %v444 = vpack.c.b16 %v435, %v434
        %v445 = vpack.c.b16 %v437, %v436
        %v470 = vunpack.c.l.b16 %v390
        %v471 = vunpack.c.l.b16 %v391
        %v472 = vunpack.c.l.b16 %v392
        %v473 = vunpack.c.l.b16 %v393
        %v474 = vunpack.c.l.b16 %v394
        %v475 = vunpack.c.l.b16 %v395
        %v476 = vunpack.c.l.b16 %v396
        %v477 = vunpack.c.l.b16 %v397
        %v478 = vunpack.c.l.b16 %v398
        %v479 = vunpack.c.l.b16 %v399
        %v480 = vunpack.c.l.b16 %v400
        %v481 = vunpack.c.l.b16 %v401
        %v482 = vunpack.c.l.b16 %v402
        %v483 = vunpack.c.l.b16 %v403
        %v484 = vunpack.c.l.b16 %v404
        %v485 = vunpack.c.l.b16 %v405
        %v486 = vpack.c.b16 %v471, %v470
        %v487 = vpack.c.b16 %v473, %v472
        %v488 = vpack.c.b16 %v475, %v474
        %v489 = vpack.c.b16 %v477, %v476
        %v490 = vpack.c.b16 %v479, %v478
        %v491 = vpack.c.b16 %v481, %v480
        %v492 = vpack.c.b16 %v483, %v482
        %v493 = vpack.c.b16 %v485, %v484
        %502 = vmatprep.subr.bf16.mxu0 0
        %503 = vmatpush1.bf16.msra.mxu0 %v486
        %504 = vmatprep.subr.bf16.mxu0 0
        %505 = vmatpush1.bf16.msra.mxu0 %v487
        %506 = vmatprep.subr.bf16.mxu0 0
        %507 = vmatpush1.bf16.msra.mxu0 %v488
        %508 = vmatprep.subr.bf16.mxu0 0
        %509 = vmatpush1.bf16.msra.mxu0 %v489
        %510 = vmatprep.subr.bf16.mxu0 0
        %511 = vmatpush1.bf16.msra.mxu0 %v490
        %512 = vmatprep.subr.bf16.mxu0 0
        %513 = vmatpush1.bf16.msra.mxu0 %v491
        %514 = vmatprep.subr.bf16.mxu0 0
        %515 = vmatpush1.bf16.msra.mxu0 %v492
        %516 = vmatprep.subr.bf16.mxu0 0
        %517 = vmatpush1.bf16.msra.mxu0 %v493
        %518 = vmatprep.subr.bf16.mxu0 0
        %519 = vmatpush1.bf16.msra.mxu0 0
        %520 = vmatprep.subr.bf16.mxu0 0
        %521 = vmatpush1.bf16.msra.mxu0 0
        %522 = vmatprep.subr.bf16.mxu0 0
        %523 = vmatpush1.bf16.msra.mxu0 0
        %524 = vmatprep.subr.bf16.mxu0 0
        %525 = vmatpush1.bf16.msra.mxu0 0
        %526 = vmatprep.subr.bf16.mxu0 0
        %527 = vmatpush1.bf16.msra.mxu0 0
        %528 = vmatprep.subr.bf16.mxu0 0
        %529 = vmatpush1.bf16.msra.mxu0 0
        %530 = vmatprep.subr.bf16.mxu0 0
        %531 = vmatpush1.bf16.msra.mxu0 0
        %532 = vmatprep.subr.bf16.mxu0 0
        %533 = vmatpush1.bf16.msra.mxu0 0
        %534 = vmatprep.mubr.bf16.mxu0 0
        %535 = vmatmul.mubr.bf16.gmra.mrb[0].mxu0 %v438
        %v536 = vpop.f32.mrb[0].mxu0
        %v537 = vadd.f32 0.0, %v536
        %v538 = vpop.f32.mrb[0].mxu0
        %v539 = vpop.f32.mrb[0].mxu0
        %v540 = vadd.f32 0.0, %v539
        %v541 = vpop.f32.mrb[0].mxu0
        %542 = vmatprep.mubr.bf16.mxu0 0
        %543 = vmatmul.mubr.bf16.gmra.mrb[0].mxu0 %v439
        %v544 = vpop.f32.mrb[0].mxu0
        %v545 = vadd.f32 0.0, %v544
        %v546 = vpop.f32.mrb[0].mxu0
        %v547 = vpop.f32.mrb[0].mxu0
        %v548 = vadd.f32 0.0, %v547
        %v549 = vpop.f32.mrb[0].mxu0
        %550 = vmatprep.mubr.bf16.mxu0 0
        %551 = vmatmul.mubr.bf16.gmra.mrb[0].mxu0 %v440
        %v552 = vpop.f32.mrb[0].mxu0
        %v553 = vadd.f32 0.0, %v552
        %v554 = vpop.f32.mrb[0].mxu0
        %v555 = vpop.f32.mrb[0].mxu0
        %v556 = vadd.f32 0.0, %v555
        %v557 = vpop.f32.mrb[0].mxu0
        %558 = vmatprep.mubr.bf16.mxu0 0
        %559 = vmatmul.mubr.bf16.gmra.mrb[0].mxu0 %v441
        %v560 = vpop.f32.mrb[0].mxu0
        %v561 = vadd.f32 0.0, %v560
        %v562 = vpop.f32.mrb[0].mxu0
        %v563 = vpop.f32.mrb[0].mxu0
        %v564 = vadd.f32 0.0, %v563
        %v565 = vpop.f32.mrb[0].mxu0
        %566 = vmatprep.mubr.bf16.mxu0 0
        %567 = vmatmul.mubr.bf16.gmra.mrb[0].mxu0 %v442
        %v568 = vpop.f32.mrb[0].mxu0
        %v569 = vadd.f32 0.0, %v568
        %v570 = vpop.f32.mrb[0].mxu0
        %v571 = vpop.f32.mrb[0].mxu0
        %v572 = vadd.f32 0.0, %v571
        %v573 = vpop.f32.mrb[0].mxu0
        %574 = vmatprep.mubr.bf16.mxu0 0
        %575 = vmatmul.mubr.bf16.gmra.mrb[0].mxu0 %v443
        %v576 = vpop.f32.mrb[0].mxu0
        %v577 = vadd.f32 0.0, %v576
        %v578 = vpop.f32.mrb[0].mxu0
        %v579 = vpop.f32.mrb[0].mxu0
        %v580 = vadd.f32 0.0, %v579
        %v581 = vpop.f32.mrb[0].mxu0
        %582 = vmatprep.mubr.bf16.mxu0 0
        %583 = vmatmul.mubr.bf16.gmra.mrb[0].mxu0 %v444
        %v584 = vpop.f32.mrb[0].mxu0
        %v585 = vadd.f32 0.0, %v584
        %v586 = vpop.f32.mrb[0].mxu0
        %v587 = vpop.f32.mrb[0].mxu0
        %v588 = vadd.f32 0.0, %v587
        %v589 = vpop.f32.mrb[0].mxu0
        %590 = vmatprep.mubr.bf16.mxu0 0
        %591 = vmatmul.mubr.bf16.gmra.mrb[0].mxu0 %v445
        %v592 = vpop.f32.mrb[0].mxu0
        %v593 = vadd.f32 0.0, %v592
        %v594 = vpop.f32.mrb[0].mxu0
        %v595 = vpop.f32.mrb[0].mxu0
        %v596 = vadd.f32 0.0, %v595
        %v597 = vpop.f32.mrb[0].mxu0
        %598 = vdwg.mxu0
        %v599 = vld [vmem:[%s304] sm:$0xf]
        %v600 = vld [vmem:[%s304 + $0x4] sm:$0xf]
        %v601 = vld [vmem:[%s304 + $0x8] sm:$0xf]
        %v602 = vld [vmem:[%s304 + $0xc] sm:$0xf]
        %v603 = vld [vmem:[%s304 + $0x10] sm:$0xf]
        %v604 = vld [vmem:[%s304 + $0x14] sm:$0xf]
        %v605 = vld [vmem:[%s304 + $0x18] sm:$0xf]
        %v606 = vld [vmem:[%s304 + $0x1c] sm:$0xf]
        %v607 = vld [vmem:[%s304 + $0x20] sm:$0xf]
        %v608 = vld [vmem:[%s304 + $0x24] sm:$0xf]
        %v609 = vld [vmem:[%s304 + $0x28] sm:$0xf]
        %v610 = vld [vmem:[%s304 + $0x2c] sm:$0xf]
        %v611 = vld [vmem:[%s304 + $0x30] sm:$0xf]
        %v612 = vld [vmem:[%s304 + $0x34] sm:$0xf]
        %v613 = vld [vmem:[%s304 + $0x38] sm:$0xf]
        %v614 = vld [vmem:[%s304 + $0x3c] sm:$0xf]
        %v615 = vld [vmem:[#allocation10] sm:$0xf]
        %v616 = vld [vmem:[#allocation10 + $0x4] sm:$0xf]
        %v617 = vld [vmem:[#allocation10 + $0x8] sm:$0xf]
        %v618 = vld [vmem:[#allocation10 + $0xc] sm:$0xf]
        %v619 = vld [vmem:[#allocation10 + $0x10] sm:$0xf]
        %v620 = vld [vmem:[#allocation10 + $0x14] sm:$0xf]
        %v621 = vld [vmem:[#allocation10 + $0x18] sm:$0xf]
        %v622 = vld [vmem:[#allocation10 + $0x1c] sm:$0xf]
        %v623 = vld [vmem:[#allocation10 + $0x20] sm:$0xf]
        %v624 = vld [vmem:[#allocation10 + $0x24] sm:$0xf]
        %v625 = vld [vmem:[#allocation10 + $0x28] sm:$0xf]
        %v626 = vld [vmem:[#allocation10 + $0x2c] sm:$0xf]
        %v627 = vld [vmem:[#allocation10 + $0x30] sm:$0xf]
        %v628 = vld [vmem:[#allocation10 + $0x34] sm:$0xf]
        %v629 = vld [vmem:[#allocation10 + $0x38] sm:$0xf]
        %v630 = vld [vmem:[#allocation10 + $0x3c] sm:$0xf]
        %v647 = vunpack.c.l.b16 %v599
        %v648 = vunpack.c.l.b16 %v600
        %v649 = vunpack.c.l.b16 %v601
        %v650 = vunpack.c.l.b16 %v602
        %v651 = vunpack.c.l.b16 %v603
        %v652 = vunpack.c.l.b16 %v604
        %v653 = vunpack.c.l.b16 %v605
        %v654 = vunpack.c.l.b16 %v606
        %v655 = vunpack.c.l.b16 %v607
        %v656 = vunpack.c.l.b16 %v608
        %v657 = vunpack.c.l.b16 %v609
        %v658 = vunpack.c.l.b16 %v610
        %v659 = vunpack.c.l.b16 %v611
        %v660 = vunpack.c.l.b16 %v612
        %v661 = vunpack.c.l.b16 %v613
        %v662 = vunpack.c.l.b16 %v614
        %v663 = vpack.c.b16 %v648, %v647
        %v664 = vpack.c.b16 %v650, %v649
        %v665 = vpack.c.b16 %v652, %v651
        %v666 = vpack.c.b16 %v654, %v653
        %v667 = vpack.c.b16 %v656, %v655
        %v668 = vpack.c.b16 %v658, %v657
        %v669 = vpack.c.b16 %v660, %v659
        %v670 = vpack.c.b16 %v662, %v661
        %v695 = vunpack.c.l.b16 %v615
        %v696 = vunpack.c.l.b16 %v616
        %v697 = vunpack.c.l.b16 %v617
        %v698 = vunpack.c.l.b16 %v618
        %v699 = vunpack.c.l.b16 %v619
        %v700 = vunpack.c.l.b16 %v620
        %v701 = vunpack.c.l.b16 %v621
        %v702 = vunpack.c.l.b16 %v622
        %v703 = vunpack.c.l.b16 %v623
        %v704 = vunpack.c.l.b16 %v624
        %v705 = vunpack.c.l.b16 %v625
        %v706 = vunpack.c.l.b16 %v626
        %v707 = vunpack.c.l.b16 %v627
        %v708 = vunpack.c.l.b16 %v628
        %v709 = vunpack.c.l.b16 %v629
        %v710 = vunpack.c.l.b16 %v630
        %v711 = vpack.c.b16 %v696, %v695
        %v712 = vpack.c.b16 %v698, %v697
        %v713 = vpack.c.b16 %v700, %v699
        %v714 = vpack.c.b16 %v702, %v701
        %v715 = vpack.c.b16 %v704, %v703
        %v716 = vpack.c.b16 %v706, %v705
        %v717 = vpack.c.b16 %v708, %v707
        %v718 = vpack.c.b16 %v710, %v709
        %727 = vmatprep.subr.bf16.mxu0 0
        %728 = vmatpush1.bf16.msra.mxu0 %v711
        %729 = vmatprep.subr.bf16.mxu0 0
        %730 = vmatpush1.bf16.msra.mxu0 %v712
        %731 = vmatprep.subr.bf16.mxu0 0
        %732 = vmatpush1.bf16.msra.mxu0 %v713
        %733 = vmatprep.subr.bf16.mxu0 0
        %734 = vmatpush1.bf16.msra.mxu0 %v714
        %735 = vmatprep.subr.bf16.mxu0 0
        %736 = vmatpush1.bf16.msra.mxu0 %v715
        %737 = vmatprep.subr.bf16.mxu0 0
        %738 = vmatpush1.bf16.msra.mxu0 %v716
        %739 = vmatprep.subr.bf16.mxu0 0
        %740 = vmatpush1.bf16.msra.mxu0 %v717
        %741 = vmatprep.subr.bf16.mxu0 0
        %742 = vmatpush1.bf16.msra.mxu0 %v718
        %743 = vmatprep.subr.bf16.mxu0 0
        %744 = vmatpush1.bf16.msra.mxu0 0
        %745 = vmatprep.subr.bf16.mxu0 0
        %746 = vmatpush1.bf16.msra.mxu0 0
        %747 = vmatprep.subr.bf16.mxu0 0
        %748 = vmatpush1.bf16.msra.mxu0 0
        %749 = vmatprep.subr.bf16.mxu0 0
        %750 = vmatpush1.bf16.msra.mxu0 0
        %751 = vmatprep.subr.bf16.mxu0 0
        %752 = vmatpush1.bf16.msra.mxu0 0
        %753 = vmatprep.subr.bf16.mxu0 0
        %754 = vmatpush1.bf16.msra.mxu0 0
        %755 = vmatprep.subr.bf16.mxu0 0
        %756 = vmatpush1.bf16.msra.mxu0 0
        %757 = vmatprep.subr.bf16.mxu0 0
        %758 = vmatpush1.bf16.msra.mxu0 0
        %759 = vmatprep.mubr.bf16.mxu0 0
        %760 = vmatmul.mubr.bf16.gmra.mrb[0].mxu0 %v663
        %v761 = vpop.f32.mrb[0].mxu0
        %v762 = vadd.f32 0.0, %v761
        %v763 = vpop.f32.mrb[0].mxu0
        %v764 = vpop.f32.mrb[0].mxu0
        %v765 = vadd.f32 0.0, %v764
        %v766 = vpop.f32.mrb[0].mxu0
        %767 = vmatprep.mubr.bf16.mxu0 0
        %768 = vmatmul.mubr.bf16.gmra.mrb[0].mxu0 %v664
        %v769 = vpop.f32.mrb[0].mxu0
        %v770 = vadd.f32 0.0, %v769
        %v771 = vpop.f32.mrb[0].mxu0
        %v772 = vpop.f32.mrb[0].mxu0
        %v773 = vadd.f32 0.0, %v772
        %v774 = vpop.f32.mrb[0].mxu0
        %775 = vmatprep.mubr.bf16.mxu0 0
        %776 = vmatmul.mubr.bf16.gmra.mrb[0].mxu0 %v665
        %v777 = vpop.f32.mrb[0].mxu0
        %v778 = vadd.f32 0.0, %v777
        %v779 = vpop.f32.mrb[0].mxu0
        %v780 = vpop.f32.mrb[0].mxu0
        %v781 = vadd.f32 0.0, %v780
        %v782 = vpop.f32.mrb[0].mxu0
        %783 = vmatprep.mubr.bf16.mxu0 0
        %784 = vmatmul.mubr.bf16.gmra.mrb[0].mxu0 %v666
        %v785 = vpop.f32.mrb[0].mxu0
        %v786 = vadd.f32 0.0, %v785
        %v787 = vpop.f32.mrb[0].mxu0
        %v788 = vpop.f32.mrb[0].mxu0
        %v789 = vadd.f32 0.0, %v788
        %v790 = vpop.f32.mrb[0].mxu0
        %791 = vmatprep.mubr.bf16.mxu0 0
        %792 = vmatmul.mubr.bf16.gmra.mrb[0].mxu0 %v667
        %v793 = vpop.f32.mrb[0].mxu0
        %v794 = vadd.f32 0.0, %v793
        %v795 = vpop.f32.mrb[0].mxu0
        %v796 = vpop.f32.mrb[0].mxu0
        %v797 = vadd.f32 0.0, %v796
        %v798 = vpop.f32.mrb[0].mxu0
        %799 = vmatprep.mubr.bf16.mxu0 0
        %800 = vmatmul.mubr.bf16.gmra.mrb[0].mxu0 %v668
        %v801 = vpop.f32.mrb[0].mxu0
        %v802 = vadd.f32 0.0, %v801
        %v803 = vpop.f32.mrb[0].mxu0
        %v804 = vpop.f32.mrb[0].mxu0
        %v805 = vadd.f32 0.0, %v804
        %v806 = vpop.f32.mrb[0].mxu0
        %807 = vmatprep.mubr.bf16.mxu0 0
        %808 = vmatmul.mubr.bf16.gmra.mrb[0].mxu0 %v669
        %v809 = vpop.f32.mrb[0].mxu0
        %v810 = vadd.f32 0.0, %v809
        %v811 = vpop.f32.mrb[0].mxu0
        %v812 = vpop.f32.mrb[0].mxu0
        %v813 = vadd.f32 0.0, %v812
        %v814 = vpop.f32.mrb[0].mxu0
        %815 = vmatprep.mubr.bf16.mxu0 0
        %816 = vmatmul.mubr.bf16.gmra.mrb[0].mxu0 %v670
        %v817 = vpop.f32.mrb[0].mxu0
        %v818 = vadd.f32 0.0, %v817
        %v819 = vpop.f32.mrb[0].mxu0
        %v820 = vpop.f32.mrb[0].mxu0
        %v821 = vadd.f32 0.0, %v820
        %v822 = vpop.f32.mrb[0].mxu0
        %823 = vdwg.mxu0
        %v824 = vlaneseq
        %v825 = vshrl.u32 %v824, 7
        %v826 = vadd.s32 %v825, 8
        %v827 = vadd.s32 %v825, 16
        %v828 = vadd.s32 %v825, 24
        %v829 = vadd.s32 %v825, 32
        %v830 = vadd.s32 %v825, 40
        %v831 = vadd.s32 %v825, 48
        %v832 = vadd.s32 %v825, 56
        %s833 = smul.u32 %s30, 64
        %v834 = vstv %s833
        %v835 = vadd.s32 %v825, %v834
        %v836 = vadd.s32 %v826, %v834
        %v837 = vadd.s32 %v827, %v834
        %v838 = vadd.s32 %v828, %v834
        %v839 = vadd.s32 %v829, %v834
        %v840 = vadd.s32 %v830, %v834
        %v841 = vadd.s32 %v831, %v834
        %v842 = vadd.s32 %v832, %v834
        %v843 = vld [vmem:[%s313] sm:$0x3]
        %v844 = vlaneseq
        %v845 = vshrl.u32 %v844, 7
        %v846 = vsub.s32 0, %v845
        %v847 = vrot.slane %v843, %v846
        %vm848 = vcmp.eq.s32.totalorder %v835, %v847
        %vm849 = vcmp.eq.s32.totalorder %v836, %v847
        %vm850 = vcmp.eq.s32.totalorder %v837, %v847
        %vm851 = vcmp.eq.s32.totalorder %v838, %v847
        %vm852 = vcmp.eq.s32.totalorder %v839, %v847
        %vm853 = vcmp.eq.s32.totalorder %v840, %v847
        %vm854 = vcmp.eq.s32.totalorder %v841, %v847
        %vm855 = vcmp.eq.s32.totalorder %v842, %v847
        %v856 = vsel %vm848, 1, 0
        %v857 = vsel %vm849, 1, 0
        %v858 = vsel %vm850, 1, 0
        %v859 = vsel %vm851, 1, 0
        %v860 = vsel %vm852, 1, 0
        %v861 = vsel %vm853, 1, 0
        %v862 = vsel %vm854, 1, 0
        %v863 = vsel %vm855, 1, 0
        %v864 = vcvt.s32.f32 %v856
        %v865 = vcvt.s32.f32 %v857
        %v866 = vcvt.s32.f32 %v858
        %v867 = vcvt.s32.f32 %v859
        %v868 = vcvt.s32.f32 %v860
        %v869 = vcvt.s32.f32 %v861
        %v870 = vcvt.s32.f32 %v862
        %v871 = vcvt.s32.f32 %v863
        %v872 = vpack.c.bf16 %v865, %v864
        %v873 = vpack.c.bf16 %v867, %v866
        %v874 = vpack.c.bf16 %v869, %v868
        %v875 = vpack.c.bf16 %v871, %v870
        %v876 = vlaneseq
        %v877 = vshrl.u32 %v876, 7
        %v878 = vsub.s32 1, %v877
        %v879 = vrot.slane %v843, %v878
        %vm880 = vcmp.eq.s32.totalorder %v835, %v879
        %vm881 = vcmp.eq.s32.totalorder %v836, %v879
        %vm882 = vcmp.eq.s32.totalorder %v837, %v879
        %vm883 = vcmp.eq.s32.totalorder %v838, %v879
        %vm884 = vcmp.eq.s32.totalorder %v839, %v879
        %vm885 = vcmp.eq.s32.totalorder %v840, %v879
        %vm886 = vcmp.eq.s32.totalorder %v841, %v879
        %vm887 = vcmp.eq.s32.totalorder %v842, %v879
        %v888 = vsel %vm880, 1, 0
        %v889 = vsel %vm881, 1, 0
        %v890 = vsel %vm882, 1, 0
        %v891 = vsel %vm883, 1, 0
        %v892 = vsel %vm884, 1, 0
        %v893 = vsel %vm885, 1, 0
        %v894 = vsel %vm886, 1, 0
        %v895 = vsel %vm887, 1, 0
        %v896 = vcvt.s32.f32 %v888
        %v897 = vcvt.s32.f32 %v889
        %v898 = vcvt.s32.f32 %v890
        %v899 = vcvt.s32.f32 %v891
        %v900 = vcvt.s32.f32 %v892
        %v901 = vcvt.s32.f32 %v893
        %v902 = vcvt.s32.f32 %v894
        %v903 = vcvt.s32.f32 %v895
        %v904 = vpack.c.bf16 %v897, %v896
        %v905 = vpack.c.bf16 %v899, %v898
        %v906 = vpack.c.bf16 %v901, %v900
        %v907 = vpack.c.bf16 %v903, %v902
        %v908 = vld [vmem:[%s357] sm:$0xff]
        %v909 = vld [vmem:[%s357 + $0x8] sm:$0xff]
        %v910 = vld [vmem:[%s357 + $0x10] sm:$0xff]
        %v911 = vld [vmem:[%s357 + $0x18] sm:$0xff]
        %v912 = vld [vmem:[%s357 + $0x20] sm:$0xff]
        %v913 = vld [vmem:[%s357 + $0x28] sm:$0xff]
        %v914 = vld [vmem:[%s357 + $0x30] sm:$0xff]
        %v915 = vld [vmem:[%s357 + $0x38] sm:$0xff]
        %v916 = vpack.c.bf16 %v540, %v537
        %v917 = vpack.c.bf16 %v548, %v545
        %v918 = vpack.c.bf16 %v556, %v553
        %v919 = vpack.c.bf16 %v564, %v561
        %v920 = vpack.c.bf16 %v572, %v569
        %v921 = vpack.c.bf16 %v580, %v577
        %v922 = vpack.c.bf16 %v588, %v585
        %v923 = vpack.c.bf16 %v596, %v593
        %v924 = vpack.c.bf16 %v765, %v762
        %v925 = vpack.c.bf16 %v773, %v770
        %v926 = vpack.c.bf16 %v781, %v778
        %v927 = vpack.c.bf16 %v789, %v786
        %v928 = vpack.c.bf16 %v797, %v794
        %v929 = vpack.c.bf16 %v805, %v802
        %v930 = vpack.c.bf16 %v813, %v810
        %v931 = vpack.c.bf16 %v821, %v818
        %932 = vmatprep.subr.bf16.mxu0 0
        %933 = vmatpush1.bf16.msra.mxu0 %v924
        %934 = vmatprep.subr.bf16.mxu0 0
        %935 = vmatpush1.bf16.msra.mxu0 %v925
        %936 = vmatprep.subr.bf16.mxu0 0
        %937 = vmatpush1.bf16.msra.mxu0 %v926
        %938 = vmatprep.subr.bf16.mxu0 0
        %939 = vmatpush1.bf16.msra.mxu0 %v927
        %940 = vmatprep.subr.bf16.mxu0 0
        %941 = vmatpush1.bf16.msra.mxu0 %v928
        %942 = vmatprep.subr.bf16.mxu0 0
        %943 = vmatpush1.bf16.msra.mxu0 %v929
        %944 = vmatprep.subr.bf16.mxu0 0
        %945 = vmatpush1.bf16.msra.mxu0 %v930
        %946 = vmatprep.subr.bf16.mxu0 0
        %947 = vmatpush1.bf16.msra.mxu0 %v931
        %948 = vmatprep.subr.bf16.mxu0 0
        %949 = vmatpush1.bf16.msra.mxu0 0
        %950 = vmatprep.subr.bf16.mxu0 0
        %951 = vmatpush1.bf16.msra.mxu0 0
        %952 = vmatprep.subr.bf16.mxu0 0
        %953 = vmatpush1.bf16.msra.mxu0 0
        %954 = vmatprep.subr.bf16.mxu0 0
        %955 = vmatpush1.bf16.msra.mxu0 0
        %956 = vmatprep.subr.bf16.mxu0 0
        %957 = vmatpush1.bf16.msra.mxu0 0
        %958 = vmatprep.subr.bf16.mxu0 0
        %959 = vmatpush1.bf16.msra.mxu0 0
        %960 = vmatprep.subr.bf16.mxu0 0
        %961 = vmatpush1.bf16.msra.mxu0 0
        %962 = vmatprep.subr.bf16.mxu0 0
        %963 = vmatpush1.bf16.msra.mxu0 0
        %964 = vmatprep.mubr.bf16.mxu0 0
        %965 = vmatmul.mubr.bf16.gmra.mrb[0].mxu0 %v904
        %v966 = vpop.f32.mrb[0].mxu0
        %v967 = vadd.f32 0.0, %v966
        %v968 = vpop.f32.mrb[0].mxu0
        %v969 = vpop.f32.mrb[0].mxu0
        %v970 = vadd.f32 0.0, %v969
        %v971 = vpop.f32.mrb[0].mxu0
        %972 = vmatprep.mubr.bf16.mxu0 0
        %973 = vmatmul.mubr.bf16.gmra.mrb[0].mxu0 %v905
        %v974 = vpop.f32.mrb[0].mxu0
        %v975 = vadd.f32 0.0, %v974
        %v976 = vpop.f32.mrb[0].mxu0
        %v977 = vpop.f32.mrb[0].mxu0
        %v978 = vadd.f32 0.0, %v977
        %v979 = vpop.f32.mrb[0].mxu0
        %980 = vmatprep.mubr.bf16.mxu0 0
        %981 = vmatmul.mubr.bf16.gmra.mrb[0].mxu0 %v906
        %v982 = vpop.f32.mrb[0].mxu0
        %v983 = vadd.f32 0.0, %v982
        %v984 = vpop.f32.mrb[0].mxu0
        %v985 = vpop.f32.mrb[0].mxu0
        %v986 = vadd.f32 0.0, %v985
        %v987 = vpop.f32.mrb[0].mxu0
        %988 = vmatprep.mubr.bf16.mxu0 0
        %989 = vmatmul.mubr.bf16.gmra.mrb[0].mxu0 %v907
        %v990 = vpop.f32.mrb[0].mxu0
        %v991 = vadd.f32 0.0, %v990
        %v992 = vpop.f32.mrb[0].mxu0
        %v993 = vpop.f32.mrb[0].mxu0
        %v994 = vadd.f32 0.0, %v993
        %v995 = vpop.f32.mrb[0].mxu0
        %996 = vdwg.mxu0
        %997 = vmatprep.subr.bf16.mxu0 0
        %998 = vmatpush1.bf16.msra.mxu0 %v916
        %999 = vmatprep.subr.bf16.mxu0 0
        %1000 = vmatpush1.bf16.msra.mxu0 %v917
        %1001 = vmatprep.subr.bf16.mxu0 0
        %1002 = vmatpush1.bf16.msra.mxu0 %v918
        %1003 = vmatprep.subr.bf16.mxu0 0
        %1004 = vmatpush1.bf16.msra.mxu0 %v919
        %1005 = vmatprep.subr.bf16.mxu0 0
        %1006 = vmatpush1.bf16.msra.mxu0 %v920
        %1007 = vmatprep.subr.bf16.mxu0 0
        %1008 = vmatpush1.bf16.msra.mxu0 %v921
        %1009 = vmatprep.subr.bf16.mxu0 0
        %1010 = vmatpush1.bf16.msra.mxu0 %v922
        %1011 = vmatprep.subr.bf16.mxu0 0
        %1012 = vmatpush1.bf16.msra.mxu0 %v923
        %1013 = vmatprep.subr.bf16.mxu0 0
        %1014 = vmatpush1.bf16.msra.mxu0 0
        %1015 = vmatprep.subr.bf16.mxu0 0
        %1016 = vmatpush1.bf16.msra.mxu0 0
        %1017 = vmatprep.subr.bf16.mxu0 0
        %1018 = vmatpush1.bf16.msra.mxu0 0
        %1019 = vmatprep.subr.bf16.mxu0 0
        %1020 = vmatpush1.bf16.msra.mxu0 0
        %1021 = vmatprep.subr.bf16.mxu0 0
        %1022 = vmatpush1.bf16.msra.mxu0 0
        %1023 = vmatprep.subr.bf16.mxu0 0
        %1024 = vmatpush1.bf16.msra.mxu0 0
        %1025 = vmatprep.subr.bf16.mxu0 0
        %1026 = vmatpush1.bf16.msra.mxu0 0
        %1027 = vmatprep.subr.bf16.mxu0 0
        %1028 = vmatpush1.bf16.msra.mxu0 0
        %1029 = vmatprep.mubr.bf16.mxu0 0
        %1030 = vmatmul.mubr.bf16.gmra.mrb[0].mxu0 %v872
        %v1031 = vpop.f32.mrb[0].mxu0
        %v1032 = vadd.f32 %v967, %v1031
        %v1033 = vpop.f32.mrb[0].mxu0
        %v1034 = vpop.f32.mrb[0].mxu0
        %v1035 = vadd.f32 %v970, %v1034
        %v1036 = vpop.f32.mrb[0].mxu0
        %1037 = vmatprep.mubr.bf16.mxu0 0
        %1038 = vmatmul.mubr.bf16.gmra.mrb[0].mxu0 %v873
        %v1039 = vpop.f32.mrb[0].mxu0
        %v1040 = vadd.f32 %v975, %v1039
        %v1041 = vpop.f32.mrb[0].mxu0
        %v1042 = vpop.f32.mrb[0].mxu0
        %v1043 = vadd.f32 %v978, %v1042
        %v1044 = vpop.f32.mrb[0].mxu0
        %1045 = vmatprep.mubr.bf16.mxu0 0
        %1046 = vmatmul.mubr.bf16.gmra.mrb[0].mxu0 %v874
        %v1047 = vpop.f32.mrb[0].mxu0
        %v1048 = vadd.f32 %v983, %v1047
        %v1049 = vpop.f32.mrb[0].mxu0
        %v1050 = vpop.f32.mrb[0].mxu0
        %v1051 = vadd.f32 %v986, %v1050
        %v1052 = vpop.f32.mrb[0].mxu0
        %1053 = vmatprep.mubr.bf16.mxu0 0
        %1054 = vmatmul.mubr.bf16.gmra.mrb[0].mxu0 %v875
        %v1055 = vpop.f32.mrb[0].mxu0
        %v1056 = vadd.f32 %v991, %v1055
        %v1057 = vpop.f32.mrb[0].mxu0
        %v1058 = vpop.f32.mrb[0].mxu0
        %v1059 = vadd.f32 %v994, %v1058
        %v1060 = vpop.f32.mrb[0].mxu0
        %1061 = vdwg.mxu0
        %v1062 = vadd.f32 %v908, %v1032
        %v1063 = vadd.f32 %v909, %v1035
        %v1064 = vadd.f32 %v910, %v1040
        %v1065 = vadd.f32 %v911, %v1043
        %v1066 = vadd.f32 %v912, %v1048
        %v1067 = vadd.f32 %v913, %v1051
        %v1068 = vadd.f32 %v914, %v1056
        %v1069 = vadd.f32 %v915, %v1059
        %1070 = vst [vmem:[%s357] sm:$0xff] %v1062
        %1071 = vst [vmem:[%s357 + $0x8] sm:$0xff] %v1063
        %1072 = vst [vmem:[%s357 + $0x10] sm:$0xff] %v1064
        %1073 = vst [vmem:[%s357 + $0x18] sm:$0xff] %v1065
        %1074 = vst [vmem:[%s357 + $0x20] sm:$0xff] %v1066
        %1075 = vst [vmem:[%s357 + $0x28] sm:$0xff] %v1067
        %1076 = vst [vmem:[%s357 + $0x30] sm:$0xff] %v1068
        %1077 = vst [vmem:[%s357 + $0x38] sm:$0xff] %v1069
        %s1078 = sand.u32 %s166, 1
        %s1079 = scalar_lea.sflag [#allocation4], %s1078
        %s1080 = sand.u32 %s166, 1
        %s1081 = smul.addr %s1080, 64
        %s1082 = scalar_lea.vmem [#allocation11], %s1081
        // Predicated region
        $region65: #{tpu_custom_call.1} parent=39 // pred_check
          %p1083 = pneg %p176
        $region66: #{tpu_custom_call.1} parent=39 // pred_check_branch
          %1085 = sbr.rel (%p1083) target = $region68
        $region67: #{tpu_custom_call.1} parent=39 // pred_region
          %s1086 = smul.u32 8, %s30
          %s1088 = ssub.s32 1024, 1024
          %1089 = vsyncadd %s1079, %s1088
          %s1090 = smul.addr %s1086, 128
          %s1091 = scalar_lea.hbm %s5, %s1090
          %s1092 = sshll.u32 %s1082, 4
          %s1093 = int_to_ptr.vmem [resolvable:$true] %s1092
          %1098 = dma.vmem_to_hbm [thread:$0]  %s1093, 1024, %s1091, %s1079, 128, 128, 8
        $region68: #{tpu_custom_call.1} parent=39 // pred_fallthru
          _
      $region40: #{tpu_custom_call.1} parent=5 // pred_fallthru
        _
      %p1099 = scmp.le.s32.totalorder 2, %s21
      // Predicated region
      $region69: #{tpu_custom_call.1} parent=5 // pred_check
        %p1100 = pneg %p1099
      $region70: #{tpu_custom_call.1} parent=5 // pred_check_branch
        %1102 = sbr.rel (%p1100) target = $region72
      $region71: #{tpu_custom_call.1} parent=5 // pred_region
        %s1103 = ssub.s32 %s21, 2
        // Predicated region
        $region73: #{tpu_custom_call.1} parent=71 // pred_check
          %p1104 = pneg %p182
        $region74: #{tpu_custom_call.1} parent=71 // pred_check_branch
          %1106 = sbr.rel (%p1104) target = $region76
        $region75: #{tpu_custom_call.1} parent=71 // pred_region
          %s1107 = sand.u32 %s167, 1
          %s1108 = scalar_lea.sflag [#allocation4], %s1107
          %s1109 = sand.u32 %s167, 1
          %s1110 = smul.addr %s1109, 64
          %s1111 = scalar_lea.vmem [#allocation11], %s1110
          %1112 = dma.done %s1108, 1024
        $region76: #{tpu_custom_call.1} parent=71 // pred_fallthru
          _
      $region72: #{tpu_custom_call.1} parent=5 // pred_fallthru
        _
    $region6: #{tpu_custom_call.1} parent=1 // loop_footer
      %s25 = sadd.s32 1, %s21
    $region7: #{tpu_custom_call.1} parent=1 // loop_footer_branch
      %20 = sbr.rel target = $region3
    $region8: #{tpu_custom_call.1} parent=1 // loop_exit
      _
    %1113 = vsyncpa [#allocation3], 1
    %s1114 = scalar_lea.sflag [#allocation3], 1
    %1115 = vsyncpa %s1114, 1
    %1116 = vsyncpa [#allocation6], 1
    %s1117 = scalar_lea.sflag [#allocation6], 1
    %1118 = vsyncpa %s1117, 1
    %1119 = vsyncpa [#allocation9], 1
    %1120 = vsyncpa [#allocation4], 1
    %s1121 = scalar_lea.sflag [#allocation4], 1
    %1122 = vsyncpa %s1121, 1

</llo_original>
